<compile_context>
chip_gen: v5e
topology: v5e:2x2
jax: 0.10.0
libtpu: 0.0.40
codegen_flags: <defaults>
</compile_context>

<pallas_src>
import functools

import jax
import jax.numpy as jnp
from jax.experimental import pallas as pl
from jax.experimental.pallas import tpu as pltpu


def _round_up(x, m):
    return (x + m - 1) // m * m


_CONV_VMEM_LIMIT = 48 * 1024 * 1024   # safe on every gen (v7x physical: 64 MiB)
_CONV_VMEM_BUDGET = 26 * 1024 * 1024  # target per-block working set for Bt choice


# ----------------------------- Linear + ReLU --------------------------------
def _linear_relu_kernel(x_ref, w_ref, b_ref, o_ref):
    acc = jnp.dot(x_ref[...], w_ref[...], preferred_element_type=jnp.float32)
    acc = jnp.maximum(acc + b_ref[...], 0.0)
    o_ref[...] = acc.astype(o_ref.dtype)


def linear_relu(x, w, b, out_dtype=jnp.bfloat16):
    """x: (B, D), w: (D, N) bf16, b: (N,) f32 -> (B, N) bf16 (w's column order)."""
    B, D = x.shape
    N = w.shape[1]
    tile_n = None
    for cand in (4096, 2048, 1024, 512, 256, 128):   # big lane-dense tiles
        if N % cand == 0:
            tile_n = cand
            break
    w_run, b_run = w, b
    if tile_n is None:
        # Guard: never stage the whole (D, N) weight as one VMEM block; pad N
        # to a lane-friendly multiple and slice the result instead.
        tile_n = 256
        n_pad = _round_up(N, tile_n)
        w_run = jnp.pad(w, ((0, 0), (0, n_pad - N)))
        b_run = jnp.pad(b, ((0, n_pad - N),))
    n_tot = w_run.shape[1]

    out = pl.pallas_call(
        _linear_relu_kernel,
        out_shape=jax.ShapeDtypeStruct((B, n_tot), out_dtype),
        grid=(n_tot // tile_n,),
        in_specs=[
            pl.BlockSpec((B, D), lambda j: (0, 0)),
            pl.BlockSpec((D, tile_n), lambda j: (0, j)),
            pl.BlockSpec((1, tile_n), lambda j: (0, j)),
        ],
        out_specs=pl.BlockSpec((B, tile_n), lambda j: (0, j)),
        compiler_params=pltpu.CompilerParams(dimension_semantics=("parallel",)),
    )(x.astype(jnp.bfloat16), w_run.astype(jnp.bfloat16),
      b_run.astype(jnp.float32).reshape(1, n_tot))
    return out if n_tot == N else out[:, :N]


# ------------- fused (BN-norm+ReLU) -> 3x3 "same" conv -> (stats|act) --------
def _conv3x3_fused_kernel(*refs, H, W, Wp, act, pre_affine, emit_stats,
                          c_out, out_mode):
    it = iter(refs)
    x_ref = next(it)                               # (Bt, H, W, Cin)   bf16
    w_ref = next(it)                               # (3, 3*Cin, Cp)    bf16
    b_ref = next(it)                               # (1, Cp)           f32
    scale_ref = next(it) if pre_affine else None   # (1, Cin)          f32
    shift_ref = next(it) if pre_affine else None   # (1, Cin)          f32
    o_ref = next(it)
    sum_ref = next(it) if emit_stats else None
    ssq_ref = next(it) if emit_stats else None
    xp_ref = next(it)                              # VMEM (Bt,H+2,Wp+2,Cin) bf16

    Bt, _, _, Cin = x_ref.shape
    Cp = w_ref.shape[2]

    # Halo: zero only the 1-px frame (+ W->Wp padding columns).  Done every
    # grid step: the grid axis is 'parallel' (megacore), so scratch
    # persistence across steps cannot be relied on.
    zrow = jnp.zeros((Bt, 1, Wp + 2, Cin), xp_ref.dtype)
    xp_ref[:, 0:1, :, :] = zrow
    xp_ref[:, H + 1:H + 2, :, :] = zrow
    xp_ref[:, 1:H + 1, 0:1, :] = jnp.zeros((Bt, H, 1, Cin), xp_ref.dtype)
    xp_ref[:, 1:H + 1, W + 1:Wp + 2, :] = jnp.zeros(
        (Bt, H, Wp + 1 - W, Cin), xp_ref.dtype)

    # Interior write with the PREVIOUS layer's BatchNorm normalize+ReLU fused.
    xin = x_ref[...]
    if pre_affine:
        xin = (xin.astype(jnp.float32) * scale_ref[...].reshape(1, 1, 1, Cin)
               + shift_ref[...].reshape(1, 1, 1, Cin))
        xin = jnp.maximum(xin, 0.0)
    xp_ref[:, 1:H + 1, 1:W + 1, :] = xin.astype(xp_ref.dtype)

    # 3 kx-shifted builds (instead of 9 misaligned tap slices), concatenated
    # along channels -> one deep-K (K = 3*Cin) MXU dot per ky (ky slices the
    # H axis, which is outside the tiled (8,128) dims and is free).
    xcat = jnp.concatenate(
        [xp_ref[:, :, kx:kx + Wp, :] for kx in range(3)], axis=-1)

    M = Bt * H * Wp
    acc = jnp.zeros((M, Cp), jnp.float32)
    for ky in range(3):
        tap = xcat[:, ky:ky + H, :, :].reshape(M, 3 * Cin)
        acc = acc + jnp.dot(tap, w_ref[ky],
                            preferred_element_type=jnp.float32)
    acc = acc + b_ref[...]
    if act == "tanh":
        acc = jnp.tanh(acc)

    out = acc.reshape(Bt, H, Wp, Cp)
    if Wp != W or Cp != c_out:
        out = out[:, :, :W, :c_out]                # drop W / Cout padding
    out_store = out.astype(o_ref.dtype)

    if emit_stats:                                 # BN stats from the values
        o32 = out_store.astype(jnp.float32)        # the next layer will read
        sum_ref[...] = jnp.sum(o32, axis=(0, 1, 2)).reshape(1, 1, c_out)
        ssq_ref[...] = jnp.sum(o32 * o32, axis=(0, 1, 2)).reshape(1, 1, c_out)

    # Lane-dense store (block is (Bt,H,W*Cout) or (Bt,1,H*W*Cout) for small
    # Cout); the wrapper reshapes back to NHWC for free.
    o_ref[...] = out_store.reshape(o_ref.shape)


def _pick_batch_block(B, H, W, Cin, Cout, budget=_CONV_VMEM_BUDGET):
    """Images per conv grid step from an explicit VMEM-footprint estimate;
    keep >=2 grid blocks when possible so both v7x TensorCores get work."""
    Wp = _round_up(W, 8)
    Cp = max(_round_up(Cout, 8), 8)

    def est(bt):
        in_b = bt * H * W * Cin * 2 * 2                 # bf16 in, double-buffered
        out_b = bt * H * W * Cp * 4 * 2                 # worst-case f32 out
        scr = bt * (H + 2) * (Wp + 2) * Cin * 2         # halo scratch (bf16)
        xcat = bt * (H + 2) * Wp * 3 * Cin * 2 * 2      # shifted builds + concat
        acc = bt * H * Wp * Cp * 4
        return in_b + out_b + scr + xcat + acc

    divs = [bt for bt in (8, 4, 2, 1) if B % bt == 0]
    fits = [bt for bt in divs if est(bt) <= budget]
    multi = [bt for bt in fits if B // bt >= 2]
    if multi:
        return multi[0]
    if fits:
        return fits[0]
    return 1


def conv3x3_fused(x, w_hwio, b, *, pre_scale=None, pre_shift=None,
                  act="none", emit_stats=False, out_dtype=None):
    """3x3 'same' conv (== ConvTranspose2d k3 s1 p1 after weight conversion).

    x: (B, H, W, Cin) NHWC; w_hwio: (3, 3, Cin, Cout); b: (Cout,).
    pre_scale/pre_shift: optional per-channel affine (fused BN) + ReLU on x.
    Returns y (B, H, W, Cout) and, if emit_stats, per-block channel (sum, sumsq).
    """
    B, H, W, Cin = x.shape
    Cout = w_hwio.shape[-1]
    Wp = _round_up(W, 8)
    Cp = max(_round_up(Cout, 8), 8)
    out_dtype = out_dtype if out_dtype is not None else jnp.bfloat16
    pre_affine = pre_scale is not None

    # Deep-K weight layout (3, 3*Cin, Cp) + Cout-padded bias.
    w_cat = w_hwio.astype(jnp.bfloat16).reshape(3, 3 * Cin, Cout)
    b_row = b.astype(jnp.float32).reshape(1, Cout)
    if Cp != Cout:
        w_cat = jnp.pad(w_cat, ((0, 0), (0, 0), (0, Cp - Cout)))
        b_row = jnp.pad(b_row, ((0, 0), (0, Cp - Cout)))

    Bt = _pick_batch_block(B, H, W, Cin, Cout)
    nb = B // Bt

    # Lane-dense output layouts for small Cout.
    if Cout >= 128:
        out_mode = 0
        y_shape = (B, H, W, Cout)
        y_spec = pl.BlockSpec((Bt, H, W, Cout), lambda n: (n, 0, 0, 0))
    elif Cout > 1:
        out_mode = 1
        y_shape = (B, H, W * Cout)
        y_spec = pl.BlockSpec((Bt, H, W * Cout), lambda n: (n, 0, 0))
    else:
        out_mode = 2
        y_shape = (B, 1, H * W * Cout)
        y_spec = pl.BlockSpec((Bt, 1, H * W * Cout), lambda n: (n, 0, 0))

    inputs = [x.astype(jnp.bfloat16), w_cat, b_row]
    in_specs = [
        pl.BlockSpec((Bt, H, W, Cin), lambda n: (n, 0, 0, 0)),
        pl.BlockSpec((3, 3 * Cin, Cp), lambda n: (0, 0, 0)),
        pl.BlockSpec((1, Cp), lambda n: (0, 0)),
    ]
    if pre_affine:
        inputs += [pre_scale.astype(jnp.float32).reshape(1, Cin),
                   pre_shift.astype(jnp.float32).reshape(1, Cin)]
        in_specs += [pl.BlockSpec((1, Cin), lambda n: (0, 0)),
                     pl.BlockSpec((1, Cin), lambda n: (0, 0))]

    if emit_stats:
        out_shape = (jax.ShapeDtypeStruct(y_shape, out_dtype),
                     jax.ShapeDtypeStruct((nb, 1, Cout), jnp.float32),
                     jax.ShapeDtypeStruct((nb, 1, Cout), jnp.float32))
        out_specs = (y_spec,
                     pl.BlockSpec((1, 1, Cout), lambda n: (n, 0, 0)),
                     pl.BlockSpec((1, 1, Cout), lambda n: (n, 0, 0)))
    else:
        out_shape = jax.ShapeDtypeStruct(y_shape, out_dtype)
        out_specs = y_spec

    kernel = functools.partial(
        _conv3x3_fused_kernel, H=H, W=W, Wp=Wp, act=act,
        pre_affine=pre_affine, emit_stats=emit_stats,
        c_out=Cout, out_mode=out_mode)

    # TODO(synk): for B <= 8 on v7x, add a second 'parallel' grid axis over H
    # halves (1-row halo in the scratch) so both TensorCores stay busy.
    res = pl.pallas_call(
        kernel,
        out_shape=out_shape,
        grid=(nb,),
        in_specs=in_specs,
        out_specs=out_specs,
        scratch_shapes=[pltpu.VMEM((Bt, H + 2, Wp + 2, Cin), jnp.bfloat16)],
        compiler_params=pltpu.CompilerParams(
            dimension_semantics=("parallel",),
            vmem_limit_bytes=_CONV_VMEM_LIMIT),
    )(*inputs)

    if emit_stats:
        y, s, q = res
        return y.reshape(B, H, W, Cout), s, q   # free reshape back to NHWC
    return res.reshape(B, H, W, Cout)


# -------------------- BatchNorm stat finalization (tiny, host-side) ----------
def _bn_scale_shift(sum_blocks, ssq_blocks, gamma, beta, count, eps=1e-5):
    """Biased-variance batch stats (PyTorch train-mode forward) -> scale/shift."""
    s = jnp.sum(sum_blocks, axis=0).reshape(-1)
    s2 = jnp.sum(ssq_blocks, axis=0).reshape(-1)
    mean = s / count
    var = jnp.maximum(s2 / count - mean * mean, 0.0)
    scale = gamma * jax.lax.rsqrt(var + eps)
    shift = beta - mean * scale
    return scale, shift


# ------------------------------ parameter setup ------------------------------
def convtranspose_to_hwio(w_t):
    """PyTorch ConvTranspose2d weight (Cin, Cout, 3, 3) -> equivalent conv HWIO."""
    return jnp.flip(w_t, axis=(2, 3)).transpose(2, 3, 0, 1)


def linear_to_nhwc(w_pt, b_pt, c0, h, w):
    """PyTorch Linear weight (out=c0*h*w, in) / bias with output columns permuted
    so the layer's output is already NHWC-flat (.., h, w, c0)."""
    n = c0 * h * w
    perm = jnp.arange(n).reshape(c0, h, w).transpose(1, 2, 0).reshape(-1)
    return w_pt.T[:, perm], b_pt[perm]


def init_params(key, latent, c0, c1, c2, c_out, h, w):
    ks = jax.random.split(key, 8)
    nflat = c0 * h * w
    # Generated in PyTorch layouts, then converted once for the kernels.
    fc_w_pt = jax.random.normal(ks[0], (nflat, latent), jnp.float32) * 0.05
    fc_b_pt = jax.random.normal(ks[1], (nflat,), jnp.float32) * 0.05
    w1_pt = jax.random.normal(ks[2], (c0, c1, 3, 3), jnp.float32) * 0.05
    b1 = jax.random.normal(ks[3], (c1,), jnp.float32) * 0.05
    w2_pt = jax.random.normal(ks[4], (c1, c2, 3, 3), jnp.float32) * 0.05
    b2 = jax.random.normal(ks[5], (c2,), jnp.float32) * 0.05
    w3_pt = jax.random.normal(ks[6], (c2, c_out, 3, 3), jnp.float32) * 0.05
    b3 = jax.random.normal(ks[7], (c_out,), jnp.float32) * 0.05

    fc_w, fc_b = linear_to_nhwc(fc_w_pt, fc_b_pt, c0, h, w)
    bf = jnp.bfloat16
    return {
        "fc_w": fc_w.astype(bf), "fc_b": fc_b.astype(jnp.float32),
        "w1": convtranspose_to_hwio(w1_pt).astype(bf), "b1": b1,
        "w2": convtranspose_to_hwio(w2_pt).astype(bf), "b2": b2,
        "w3": convtranspose_to_hwio(w3_pt).astype(bf), "b3": b3,
        "g1": jnp.ones((c1,), jnp.float32), "be1": jnp.zeros((c1,), jnp.float32),
        "g2": jnp.ones((c2,), jnp.float32), "be2": jnp.zeros((c2,), jnp.float32),
    }


# ------------------------------- forward pass --------------------------------
def decoder_forward(x, params, *, c0, h, w, eps=1e-5):
    """x: (B, latent) -> (B, 1, H, W), matching the PyTorch module (NCHW out)."""
    B = x.shape[0]
    hflat = linear_relu(x, params["fc_w"], params["fc_b"])  # (B, h*w*c0) NHWC order
    feat = hflat.reshape(B, h, w, c0)                       # free reshape

    # convT1 (+ per-block BN1 stats in the epilogue)
    y1, s1, q1 = conv3x3_fused(feat, params["w1"], params["b1"], emit_stats=True)
    sc1, sh1 = _bn_scale_shift(s1, q1, params["g1"], params["be1"], B * h * w, eps)

    # BN1-normalize+ReLU fused into convT2's input path (+ BN2 stats)
    y2, s2, q2 = conv3x3_fused(y1, params["w2"], params["b2"],
                               pre_scale=sc1, pre_shift=sh1, emit_stats=True)
    sc2, sh2 = _bn_scale_shift(s2, q2, params["g2"], params["be2"], B * h * w, eps)

    # BN2-normalize+ReLU fused into convT3's input path, + Tanh
    y3 = conv3x3_fused(y2, params["w3"], params["b3"],
                       pre_scale=sc2, pre_shift=sh2, act="tanh",
                       out_dtype=jnp.float32)
    # TODO(synk): BatchNorm running_mean/running_var tracking (training-only
    # side effect) is not reproduced; forward matches PyTorch train-mode.
    return y3.transpose(0, 3, 1, 2)  # NHWC -> NCHW (Cout == 1, layout-trivial)


# ------------------------------ pure-JAX reference ---------------------------
def _reference_forward(x, params, *, c0, h, w, eps=1e-5):
    """f32 reference that mirrors the kernel's bf16 storage points."""
    f32 = jnp.float32
    cast = lambda v: v.astype(jnp.bfloat16).astype(f32)
    B = x.shape[0]

    hflat = cast(jnp.maximum(
        cast(x) @ params["fc_w"].astype(f32) + params["fc_b"].astype(f32), 0.0))
    feat = hflat.reshape(B, h, w, c0)

    def conv(v, wgt, bias):
        return jax.lax.conv_general_dilated(
            v, wgt.astype(f32), window_strides=(1, 1), padding="SAME",
            dimension_numbers=("NHWC", "HWIO", "NHWC")) + bias.astype(f32)

    def bn_scale_shift(v_stored, g, be):
        mean = v_stored.mean(axis=(0, 1, 2))
        var = jnp.maximum((v_stored * v_stored).mean(axis=(0, 1, 2))
                          - mean * mean, 0.0)
        scale = g * jax.lax.rsqrt(var + eps)
        shift = be - mean * scale
        return scale, shift

    y1s = cast(conv(feat, params["w1"], params["b1"]))
    sc1, sh1 = bn_scale_shift(y1s, params["g1"], params["be1"])
    z1 = cast(jnp.maximum(y1s * sc1 + sh1, 0.0))

    y2s = cast(conv(z1, params["w2"], params["b2"]))
    sc2, sh2 = bn_scale_shift(y2s, params["g2"], params["be2"])
    z2 = cast(jnp.maximum(y2s * sc2 + sh2, 0.0))

    y3 = jnp.tanh(conv(z2, params["w3"], params["b3"]))
    return y3.transpose(0, 3, 1, 2)


if __name__ == "__main__":
    # Scaled-down config (full module: latent=256, c0=256, c1=128, c2=64,
    # c_out=1, h=w=28 — structurally identical).
    B, LATENT = 2, 32
    C0, C1, C2, C_OUT = 32, 16, 8, 1
    H = W = 8

    key = jax.random.PRNGKey(0)
    k_x, k_p = jax.random.split(key)
    x = jax.random.normal(k_x, (B, LATENT), jnp.float32)
    params = init_params(k_p, LATENT, C0, C1, C2, C_OUT, H, W)

    out = jax.block_until_ready(decoder_forward(x, params, c0=C0, h=H, w=W))
    assert out.shape == (B, C_OUT, H, W), out.shape
    assert bool(jnp.all(jnp.isfinite(out)))

    ref = jax.block_until_ready(_reference_forward(x, params, c0=C0, h=H, w=W))
    max_err = float(jnp.max(jnp.abs(out - ref)))
    assert max_err < 2e-2, max_err

    print("KERNEL_OK")
</pallas_src>

<mosaic_0001>
module attributes {stable_mosaic.version = 11 : i64} {
  func.func @_linear_relu_kernel(%arg0: i32, %arg1: memref<2x32xbf16, #tpu.memory_space<vmem>>, %arg2: memref<32x2048xbf16, #tpu.memory_space<vmem>>, %arg3: memref<1x2048xf32, #tpu.memory_space<vmem>>, %arg4: memref<2x2048xbf16, #tpu.memory_space<vmem>>) attributes {dimension_semantics = [#tpu.dimension_semantics<parallel>], iteration_bounds = array<i64: 1>, scalar_prefetch = 0 : i64, scratch_operands = 0 : i64, tpu.core_type = #tpu.core_type<tc>, window_params = [{pipeline_mode = #tpu.pipeline_mode<synchronous>, transform_indices = @transform_0, window_bounds = array<i64: 2, 32>}, {transform_indices = @transform_1, window_bounds = array<i64: 32, 2048>}, {transform_indices = @transform_2, window_bounds = array<i64: 1, 2048>}, {transform_indices = @transform_3, window_bounds = array<i64: 2, 2048>}]} {
    %c0 = arith.constant 0 : index
    %c0_0 = arith.constant 0 : index
    %0 = vector.load %arg1[%c0, %c0_0] : memref<2x32xbf16, #tpu.memory_space<vmem>>, vector<2x32xbf16>
    %c0_1 = arith.constant 0 : index
    %c0_2 = arith.constant 0 : index
    %1 = vector.load %arg2[%c0_1, %c0_2] : memref<32x2048xbf16, #tpu.memory_space<vmem>>, vector<32x2048xbf16>
    %cst = arith.constant dense<0.000000e+00> : vector<2x2048xf32>
    %2 = tpu.matmul %0, %1, %cst {dimension_numbers = #tpu.dot_dimension_numbers<[1], [0], [0], [1], [0, 0, 1, 1], [], []>} : vector<2x32xbf16>, vector<32x2048xbf16>, vector<2x2048xf32> -> vector<2x2048xf32>
    %c0_3 = arith.constant 0 : index
    %c0_4 = arith.constant 0 : index
    %3 = vector.load %arg3[%c0_3, %c0_4] : memref<1x2048xf32, #tpu.memory_space<vmem>>, vector<1x2048xf32>
    %4 = vector.broadcast %3 : vector<1x2048xf32> to vector<2x2048xf32>
    %5 = arith.addf %2, %4 : vector<2x2048xf32>
    %cst_5 = arith.constant 0.000000e+00 : f32
    %6 = vector.broadcast %cst_5 : f32 to vector<2x2048xf32>
    %7 = arith.maximumf %5, %6 : vector<2x2048xf32>
    %8 = arith.truncf %7 : vector<2x2048xf32> to vector<2x2048xbf16>
    %c0_6 = arith.constant 0 : index
    %c0_7 = arith.constant 0 : index
    %9 = vector.load %arg4[%c0_6, %c0_7] : memref<2x2048xbf16, #tpu.memory_space<vmem>>, vector<2x2048xbf16>
    tpu.vector_store %arg4[%c0_6, %c0_7], %8 {strides = array<i32>} : memref<2x2048xbf16, #tpu.memory_space<vmem>>, vector<2x2048xbf16>,
    return
  }
  func.func @transform_0(%arg0: i32) -> (i32, i32) {
    %c0_i32 = arith.constant 0 : i32
    %c0_i32_0 = arith.constant 0 : i32
    %c0_i32_1 = arith.constant 0 : i32
    return %c0_i32, %c0_i32_0 : i32, i32
  }
  func.func @transform_1(%arg0: i32) -> (i32, i32) {
    %c0_i32 = arith.constant 0 : i32
    %c0_i32_0 = arith.constant 0 : i32
    return %c0_i32, %arg0 : i32, i32
  }
  func.func @transform_2(%arg0: i32) -> (i32, i32) {
    %c0_i32 = arith.constant 0 : i32
    %c0_i32_0 = arith.constant 0 : i32
    return %c0_i32, %arg0 : i32, i32
  }
  func.func @transform_3(%arg0: i32) -> (i32, i32) {
    %c0_i32 = arith.constant 0 : i32
    %c0_i32_0 = arith.constant 0 : i32
    return %c0_i32, %arg0 : i32, i32
  }
}

</mosaic_0001>

<llo_original>
// kernel: tpu_custom_call.1
$region0: #{tpu_custom_call.1}
  #allocation0 [shape = 'u32[]', space=smem, size = 0x4, offset = 0x4, fixed_abs, tag = 'smem constant byte address 0x4 - core index']
  #allocation1 [shape = 'u32[72,128]{1,0:T(1,128)}', space=vmem, size = 0x9000, scoped, tag = 'internal scratch']
  %s0 = inlined_call_operand.hbm [shape: bf16[2,32], index: 0, kind: input, shape index: {}]
  %s1 = inlined_call_operand.hbm [shape: bf16[32,2048], index: 1, kind: input, shape index: {}]
  %s2 = inlined_call_operand.hbm [shape: f32[1,2048], index: 2, kind: input, shape index: {}]
  %s3 = inlined_call_operand.hbm [shape: bf16[2,2048], index: 3, kind: output, shape index: {}]
  %s4 = sld [smem:[#allocation0]]
  $region34: #{tpu_custom_call.1} parent=0
    _
  %s6 = ssub.s32 1, %s4
  %s7 = scalar_select 0, %s6, %s4
  $region1: #{tpu_custom_call.1} parent=0
    #allocation2 [shape = 'u8[512]{0}', space=vmem, size = 0x400, scoped, tag = 'input window, operand 0, single buffered']
    #allocation3 [shape = 's32[1]{0}', space=sflag, size = 0x4, scoped, tag = 'scoped memory for tpu_custom_call.1']
    #allocation4 [shape = 's32[1]{0}', space=sflag, size = 0x4, scoped, tag = 'scoped memory for tpu_custom_call.1']
    #allocation5 [shape = 'u8[131072]{0}', space=vmem, size = 0x20000, scoped, tag = 'input window, operand 1, single buffered']
    #allocation6 [shape = 's32[1]{0}', space=sflag, size = 0x4, scoped, tag = 'scoped memory for tpu_custom_call.1']
    #allocation7 [shape = 'u8[8192]{0}', space=vmem, size = 0x2000, scoped, tag = 'input window, operand 2, single buffered']
    #allocation8 [shape = 'u8[8192]{0}', space=vmem, size = 0x2000, scoped, tag = 'output window, operand 0, single buffered']
    %8 = vsyncpa [#allocation3], 0
    %9 = vsyncpa [#allocation6], 0
    %10 = vsyncpa [#allocation4], 0
    // Predicated region
    $region2: #{tpu_custom_call.1} parent=1 // pred_check
      _
    $region3: #{tpu_custom_call.1} parent=1 // pred_check_branch
      %12 = sbr.rel (0) target = $region5
    $region4: #{tpu_custom_call.1} parent=1 // pred_region
      %14 = vsyncadd [#allocation3], 0
      %s16 = sshll.u32 %s0, 4
      %s17 = int_to_ptr.hbm [resolvable:$true] %s16
      %s18 = sshll.u32 [#allocation2], 4
      %s19 = int_to_ptr.vmem [resolvable:$true] %s18
      %21 = dma.hbm_to_vmem [thread:$0]  %s17, 16, %s19, [#allocation3]
    $region5: #{tpu_custom_call.1} parent=1 // pred_fallthru
      _
    // Predicated region
    $region6: #{tpu_custom_call.1} parent=1 // pred_check
      _
    $region7: #{tpu_custom_call.1} parent=1 // pred_check_branch
      %23 = sbr.rel (0) target = $region9
    $region8: #{tpu_custom_call.1} parent=1 // pred_region
      %25 = vsyncadd [#allocation6], 0
      %s26 = sshll.u32 %s1, 4
      %s27 = int_to_ptr.hbm [resolvable:$true] %s26
      %s28 = sshll.u32 [#allocation5], 4
      %s29 = int_to_ptr.vmem [resolvable:$true] %s28
      %34 = dma.hbm_to_vmem [thread:$0]  %s27, 4096, %s29, [#allocation6], 1024, 1024, 64
    $region9: #{tpu_custom_call.1} parent=1 // pred_fallthru
      _
    // Predicated region
    $region10: #{tpu_custom_call.1} parent=1 // pred_check
      _
    $region11: #{tpu_custom_call.1} parent=1 // pred_check_branch
      %36 = sbr.rel (0) target = $region13
    $region12: #{tpu_custom_call.1} parent=1 // pred_region
      %38 = vsyncadd [#allocation6], 0
      %s40 = sshll.u32 %s2, 4
      %s41 = int_to_ptr.hbm [resolvable:$true] %s40
      %s42 = sshll.u32 [#allocation7], 4
      %s43 = int_to_ptr.vmem [resolvable:$true] %s42
      %45 = dma.hbm_to_vmem [thread:$0]  %s41, 256, %s43, [#allocation6]
    $region13: #{tpu_custom_call.1} parent=1 // pred_fallthru
      _
    // Predicated region
    $region14: #{tpu_custom_call.1} parent=1 // pred_check
      _
    $region15: #{tpu_custom_call.1} parent=1 // pred_check_branch
      %47 = sbr.rel (0) target = $region17
    $region16: #{tpu_custom_call.1} parent=1 // pred_region
      %49 = dma.done [#allocation3], 16
    $region17: #{tpu_custom_call.1} parent=1 // pred_fallthru
      _
    // Predicated region
    $region18: #{tpu_custom_call.1} parent=1 // pred_check
      _
    $region19: #{tpu_custom_call.1} parent=1 // pred_check_branch
      %51 = sbr.rel (0) target = $region21
    $region20: #{tpu_custom_call.1} parent=1 // pred_region
      %53 = dma.done [#allocation6], 4096
    $region21: #{tpu_custom_call.1} parent=1 // pred_fallthru
      _
    // Predicated region
    $region22: #{tpu_custom_call.1} parent=1 // pred_check
      _
    $region23: #{tpu_custom_call.1} parent=1 // pred_check_branch
      %55 = sbr.rel (0) target = $region25
    $region24: #{tpu_custom_call.1} parent=1 // pred_region
      %57 = dma.done [#allocation6], 256
    $region25: #{tpu_custom_call.1} parent=1 // pred_fallthru
      _
    %v59 = vld [vmem:[#allocation2] sm:$0x1]
    %v60 = vld [vmem:[#allocation5] sm:$0xff]
    %v61 = vld [vmem:[#allocation5 + $0x8] sm:$0xff]
    %v62 = vld [vmem:[#allocation5 + $0x10] sm:$0xff]
    %v63 = vld [vmem:[#allocation5 + $0x18] sm:$0xff]
    %v64 = vld [vmem:[#allocation5 + $0x20] sm:$0xff]
    %v65 = vld [vmem:[#allocation5 + $0x28] sm:$0xff]
    %v66 = vld [vmem:[#allocation5 + $0x30] sm:$0xff]
    %v67 = vld [vmem:[#allocation5 + $0x38] sm:$0xff]
    %v68 = vld [vmem:[#allocation5 + $0x40] sm:$0xff]
    %v69 = vld [vmem:[#allocation5 + $0x48] sm:$0xff]
    %v70 = vld [vmem:[#allocation5 + $0x50] sm:$0xff]
    %v71 = vld [vmem:[#allocation5 + $0x58] sm:$0xff]
    %v72 = vld [vmem:[#allocation5 + $0x60] sm:$0xff]
    %v73 = vld [vmem:[#allocation5 + $0x68] sm:$0xff]
    %v74 = vld [vmem:[#allocation5 + $0x70] sm:$0xff]
    %v75 = vld [vmem:[#allocation5 + $0x78] sm:$0xff]
    %v76 = vld [vmem:[#allocation5 + $0x80] sm:$0xff]
    %v77 = vld [vmem:[#allocation5 + $0x88] sm:$0xff]
    %v78 = vld [vmem:[#allocation5 + $0x90] sm:$0xff]
    %v79 = vld [vmem:[#allocation5 + $0x98] sm:$0xff]
    %v80 = vld [vmem:[#allocation5 + $0xa0] sm:$0xff]
    %v81 = vld [vmem:[#allocation5 + $0xa8] sm:$0xff]
    %v82 = vld [vmem:[#allocation5 + $0xb0] sm:$0xff]
    %v83 = vld [vmem:[#allocation5 + $0xb8] sm:$0xff]
    %v84 = vld [vmem:[#allocation5 + $0xc0] sm:$0xff]
    %v85 = vld [vmem:[#allocation5 + $0xc8] sm:$0xff]
    %v86 = vld [vmem:[#allocation5 + $0xd0] sm:$0xff]
    %v87 = vld [vmem:[#allocation5 + $0xd8] sm:$0xff]
    %v88 = vld [vmem:[#allocation5 + $0xe0] sm:$0xff]
    %v89 = vld [vmem:[#allocation5 + $0xe8] sm:$0xff]
    %v90 = vld [vmem:[#allocation5 + $0xf0] sm:$0xff]
    %v91 = vld [vmem:[#allocation5 + $0xf8] sm:$0xff]
    %v92 = vld [vmem:[#allocation7] sm:$0xff]
    %v93 = vld [vmem:[#allocation7 + $0x8] sm:$0xff]
    %v96 = vperm.slane %v92, 0
    %v97 = vperm.slane %v92, 1
    %v98 = vperm.slane %v92, 2
    %v99 = vperm.slane %v92, 3
    %v100 = vperm.slane %v92, 4
    %v101 = vperm.slane %v92, 5
    %v102 = vperm.slane %v92, 6
    %v103 = vperm.slane %v92, 7
    %v104 = vperm.slane %v93, 0
    %v105 = vperm.slane %v93, 1
    %v106 = vperm.slane %v93, 2
    %v107 = vperm.slane %v93, 3
    %v108 = vperm.slane %v93, 4
    %v109 = vperm.slane %v93, 5
    %v110 = vperm.slane %v93, 6
    %v111 = vperm.slane %v93, 7
    %v160 = vunpack.c.l.b16 %v60
    %v161 = vunpack.c.h.b16 %v60
    %v162 = vunpack.c.l.b16 %v61
    %v163 = vunpack.c.h.b16 %v61
    %v164 = vunpack.c.l.b16 %v62
    %v165 = vunpack.c.h.b16 %v62
    %v166 = vunpack.c.l.b16 %v63
    %v167 = vunpack.c.h.b16 %v63
    %v168 = vunpack.c.l.b16 %v64
    %v169 = vunpack.c.h.b16 %v64
    %v170 = vunpack.c.l.b16 %v65
    %v171 = vunpack.c.h.b16 %v65
    %v172 = vunpack.c.l.b16 %v66
    %v173 = vunpack.c.h.b16 %v66
    %v174 = vunpack.c.l.b16 %v67
    %v175 = vunpack.c.h.b16 %v67
    %v176 = vunpack.c.l.b16 %v68
    %v177 = vunpack.c.h.b16 %v68
    %v178 = vunpack.c.l.b16 %v69
    %v179 = vunpack.c.h.b16 %v69
    %v180 = vunpack.c.l.b16 %v70
    %v181 = vunpack.c.h.b16 %v70
    %v182 = vunpack.c.l.b16 %v71
    %v183 = vunpack.c.h.b16 %v71
    %v184 = vunpack.c.l.b16 %v72
    %v185 = vunpack.c.h.b16 %v72
    %v186 = vunpack.c.l.b16 %v73
    %v187 = vunpack.c.h.b16 %v73
    %v188 = vunpack.c.l.b16 %v74
    %v189 = vunpack.c.h.b16 %v74
    %v190 = vunpack.c.l.b16 %v75
    %v191 = vunpack.c.h.b16 %v75
    %v192 = vunpack.c.l.b16 %v76
    %v193 = vunpack.c.h.b16 %v76
    %v194 = vunpack.c.l.b16 %v77
    %v195 = vunpack.c.h.b16 %v77
    %v196 = vunpack.c.l.b16 %v78
    %v197 = vunpack.c.h.b16 %v78
    %v198 = vunpack.c.l.b16 %v79
    %v199 = vunpack.c.h.b16 %v79
    %v200 = vunpack.c.l.b16 %v80
    %v201 = vunpack.c.h.b16 %v80
    %v202 = vunpack.c.l.b16 %v81
    %v203 = vunpack.c.h.b16 %v81
    %v204 = vunpack.c.l.b16 %v82
    %v205 = vunpack.c.h.b16 %v82
    %v206 = vunpack.c.l.b16 %v83
    %v207 = vunpack.c.h.b16 %v83
    %v208 = vunpack.c.l.b16 %v84
    %v209 = vunpack.c.h.b16 %v84
    %v210 = vunpack.c.l.b16 %v85
    %v211 = vunpack.c.h.b16 %v85
    %v212 = vunpack.c.l.b16 %v86
    %v213 = vunpack.c.h.b16 %v86
    %v214 = vunpack.c.l.b16 %v87
    %v215 = vunpack.c.h.b16 %v87
    %v216 = vunpack.c.l.b16 %v88
    %v217 = vunpack.c.h.b16 %v88
    %v218 = vunpack.c.l.b16 %v89
    %v219 = vunpack.c.h.b16 %v89
    %v220 = vunpack.c.l.b16 %v90
    %v221 = vunpack.c.h.b16 %v90
    %v222 = vunpack.c.l.b16 %v91
    %v223 = vunpack.c.h.b16 %v91
    %v224 = vpack.c.b16 %v176, %v160
    %v225 = vpack.c.b16 %v177, %v161
    %v226 = vpack.c.b16 %v178, %v162
    %v227 = vpack.c.b16 %v179, %v163
    %v228 = vpack.c.b16 %v180, %v164
    %v229 = vpack.c.b16 %v181, %v165
    %v230 = vpack.c.b16 %v182, %v166
    %v231 = vpack.c.b16 %v183, %v167
    %v232 = vpack.c.b16 %v184, %v168
    %v233 = vpack.c.b16 %v185, %v169
    %v234 = vpack.c.b16 %v186, %v170
    %v235 = vpack.c.b16 %v187, %v171
    %v236 = vpack.c.b16 %v188, %v172
    %v237 = vpack.c.b16 %v189, %v173
    %v238 = vpack.c.b16 %v190, %v174
    %v239 = vpack.c.b16 %v191, %v175
    %v240 = vpack.c.b16 %v208, %v192
    %v241 = vpack.c.b16 %v209, %v193
    %v242 = vpack.c.b16 %v210, %v194
    %v243 = vpack.c.b16 %v211, %v195
    %v244 = vpack.c.b16 %v212, %v196
    %v245 = vpack.c.b16 %v213, %v197
    %v246 = vpack.c.b16 %v214, %v198
    %v247 = vpack.c.b16 %v215, %v199
    %v248 = vpack.c.b16 %v216, %v200
    %v249 = vpack.c.b16 %v217, %v201
    %v250 = vpack.c.b16 %v218, %v202
    %v251 = vpack.c.b16 %v219, %v203
    %v252 = vpack.c.b16 %v220, %v204
    %v253 = vpack.c.b16 %v221, %v205
    %v254 = vpack.c.b16 %v222, %v206
    %v255 = vpack.c.b16 %v223, %v207
    %vm288 = vcmask 261120
    %v290 = vsel %vm288, %v59, 0
    %292 = vmatpush.bf16.msra.mxu0 0
    %293 = vmatpush.bf16.msra.mxu0 0
    %294 = vmatpush.bf16.msra.mxu0 0
    %295 = vmatpush.bf16.msra.mxu0 0
    %296 = vmatpush.bf16.msra.mxu0 0
    %297 = vmatpush.bf16.msra.mxu0 0
    %298 = vmatpush.bf16.msra.mxu0 %v240
    %299 = vmatpush.bf16.msra.mxu0 %v224
    %300 = vmatmul.bf16.gmra.mxu0 %v290
    %v301 = vpop.f32.mrf.mxu0
    %v302 = vadd.f32 %v96, %v301
    %v303 = vpop.f32.mrf.mxu0
    %304 = vdwg.mxu0
    %305 = vmatpush.bf16.msra.mxu0 0
    %306 = vmatpush.bf16.msra.mxu0 0
    %307 = vmatpush.bf16.msra.mxu0 0
    %308 = vmatpush.bf16.msra.mxu0 0
    %309 = vmatpush.bf16.msra.mxu0 0
    %310 = vmatpush.bf16.msra.mxu0 0
    %311 = vmatpush.bf16.msra.mxu0 %v241
    %312 = vmatpush.bf16.msra.mxu0 %v225
    %313 = vmatmul.bf16.gmra.mxu0 %v290
    %v314 = vpop.f32.mrf.mxu0
    %v315 = vadd.f32 %v97, %v314
    %v316 = vpop.f32.mrf.mxu0
    %317 = vdwg.mxu0
    %318 = vmatpush.bf16.msra.mxu0 0
    %319 = vmatpush.bf16.msra.mxu0 0
    %320 = vmatpush.bf16.msra.mxu0 0
    %321 = vmatpush.bf16.msra.mxu0 0
    %322 = vmatpush.bf16.msra.mxu0 0
    %323 = vmatpush.bf16.msra.mxu0 0
    %324 = vmatpush.bf16.msra.mxu0 %v242
    %325 = vmatpush.bf16.msra.mxu0 %v226
    %326 = vmatmul.bf16.gmra.mxu0 %v290
    %v327 = vpop.f32.mrf.mxu0
    %v328 = vadd.f32 %v98, %v327
    %v329 = vpop.f32.mrf.mxu0
    %330 = vdwg.mxu0
    %331 = vmatpush.bf16.msra.mxu0 0
    %332 = vmatpush.bf16.msra.mxu0 0
    %333 = vmatpush.bf16.msra.mxu0 0
    %334 = vmatpush.bf16.msra.mxu0 0
    %335 = vmatpush.bf16.msra.mxu0 0
    %336 = vmatpush.bf16.msra.mxu0 0
    %337 = vmatpush.bf16.msra.mxu0 %v243
    %338 = vmatpush.bf16.msra.mxu0 %v227
    %339 = vmatmul.bf16.gmra.mxu0 %v290
    %v340 = vpop.f32.mrf.mxu0
    %v341 = vadd.f32 %v99, %v340
    %v342 = vpop.f32.mrf.mxu0
    %343 = vdwg.mxu0
    %344 = vmatpush.bf16.msra.mxu0 0
    %345 = vmatpush.bf16.msra.mxu0 0
    %346 = vmatpush.bf16.msra.mxu0 0
    %347 = vmatpush.bf16.msra.mxu0 0
    %348 = vmatpush.bf16.msra.mxu0 0
    %349 = vmatpush.bf16.msra.mxu0 0
    %350 = vmatpush.bf16.msra.mxu0 %v244
    %351 = vmatpush.bf16.msra.mxu0 %v228
    %352 = vmatmul.bf16.gmra.mxu0 %v290
    %v353 = vpop.f32.mrf.mxu0
    %v354 = vadd.f32 %v100, %v353
    %v355 = vpop.f32.mrf.mxu0
    %356 = vdwg.mxu0
    %357 = vmatpush.bf16.msra.mxu0 0
    %358 = vmatpush.bf16.msra.mxu0 0
    %359 = vmatpush.bf16.msra.mxu0 0
    %360 = vmatpush.bf16.msra.mxu0 0
    %361 = vmatpush.bf16.msra.mxu0 0
    %362 = vmatpush.bf16.msra.mxu0 0
    %363 = vmatpush.bf16.msra.mxu0 %v245
    %364 = vmatpush.bf16.msra.mxu0 %v229
    %365 = vmatmul.bf16.gmra.mxu0 %v290
    %v366 = vpop.f32.mrf.mxu0
    %v367 = vadd.f32 %v101, %v366
    %v368 = vpop.f32.mrf.mxu0
    %369 = vdwg.mxu0
    %370 = vmatpush.bf16.msra.mxu0 0
    %371 = vmatpush.bf16.msra.mxu0 0
    %372 = vmatpush.bf16.msra.mxu0 0
    %373 = vmatpush.bf16.msra.mxu0 0
    %374 = vmatpush.bf16.msra.mxu0 0
    %375 = vmatpush.bf16.msra.mxu0 0
    %376 = vmatpush.bf16.msra.mxu0 %v246
    %377 = vmatpush.bf16.msra.mxu0 %v230
    %378 = vmatmul.bf16.gmra.mxu0 %v290
    %v379 = vpop.f32.mrf.mxu0
    %v380 = vadd.f32 %v102, %v379
    %v381 = vpop.f32.mrf.mxu0
    %382 = vdwg.mxu0
    %383 = vmatpush.bf16.msra.mxu0 0
    %384 = vmatpush.bf16.msra.mxu0 0
    %385 = vmatpush.bf16.msra.mxu0 0
    %386 = vmatpush.bf16.msra.mxu0 0
    %387 = vmatpush.bf16.msra.mxu0 0
    %388 = vmatpush.bf16.msra.mxu0 0
    %389 = vmatpush.bf16.msra.mxu0 %v247
    %390 = vmatpush.bf16.msra.mxu0 %v231
    %391 = vmatmul.bf16.gmra.mxu0 %v290
    %v392 = vpop.f32.mrf.mxu0
    %v393 = vadd.f32 %v103, %v392
    %v394 = vpop.f32.mrf.mxu0
    %395 = vdwg.mxu0
    %396 = vmatpush.bf16.msra.mxu0 0
    %397 = vmatpush.bf16.msra.mxu0 0
    %398 = vmatpush.bf16.msra.mxu0 0
    %399 = vmatpush.bf16.msra.mxu0 0
    %400 = vmatpush.bf16.msra.mxu0 0
    %401 = vmatpush.bf16.msra.mxu0 0
    %402 = vmatpush.bf16.msra.mxu0 %v248
    %403 = vmatpush.bf16.msra.mxu0 %v232
    %404 = vmatmul.bf16.gmra.mxu0 %v290
    %v405 = vpop.f32.mrf.mxu0
    %v406 = vadd.f32 %v104, %v405
    %v407 = vpop.f32.mrf.mxu0
    %408 = vdwg.mxu0
    %409 = vmatpush.bf16.msra.mxu0 0
    %410 = vmatpush.bf16.msra.mxu0 0
    %411 = vmatpush.bf16.msra.mxu0 0
    %412 = vmatpush.bf16.msra.mxu0 0
    %413 = vmatpush.bf16.msra.mxu0 0
    %414 = vmatpush.bf16.msra.mxu0 0
    %415 = vmatpush.bf16.msra.mxu0 %v249
    %416 = vmatpush.bf16.msra.mxu0 %v233
    %417 = vmatmul.bf16.gmra.mxu0 %v290
    %v418 = vpop.f32.mrf.mxu0
    %v419 = vadd.f32 %v105, %v418
    %v420 = vpop.f32.mrf.mxu0
    %421 = vdwg.mxu0
    %422 = vmatpush.bf16.msra.mxu0 0
    %423 = vmatpush.bf16.msra.mxu0 0
    %424 = vmatpush.bf16.msra.mxu0 0
    %425 = vmatpush.bf16.msra.mxu0 0
    %426 = vmatpush.bf16.msra.mxu0 0
    %427 = vmatpush.bf16.msra.mxu0 0
    %428 = vmatpush.bf16.msra.mxu0 %v250
    %429 = vmatpush.bf16.msra.mxu0 %v234
    %430 = vmatmul.bf16.gmra.mxu0 %v290
    %v431 = vpop.f32.mrf.mxu0
    %v432 = vadd.f32 %v106, %v431
    %v433 = vpop.f32.mrf.mxu0
    %434 = vdwg.mxu0
    %435 = vmatpush.bf16.msra.mxu0 0
    %436 = vmatpush.bf16.msra.mxu0 0
    %437 = vmatpush.bf16.msra.mxu0 0
    %438 = vmatpush.bf16.msra.mxu0 0
    %439 = vmatpush.bf16.msra.mxu0 0
    %440 = vmatpush.bf16.msra.mxu0 0
    %441 = vmatpush.bf16.msra.mxu0 %v251
    %442 = vmatpush.bf16.msra.mxu0 %v235
    %443 = vmatmul.bf16.gmra.mxu0 %v290
    %v444 = vpop.f32.mrf.mxu0
    %v445 = vadd.f32 %v107, %v444
    %v446 = vpop.f32.mrf.mxu0
    %447 = vdwg.mxu0
    %448 = vmatpush.bf16.msra.mxu0 0
    %449 = vmatpush.bf16.msra.mxu0 0
    %450 = vmatpush.bf16.msra.mxu0 0
    %451 = vmatpush.bf16.msra.mxu0 0
    %452 = vmatpush.bf16.msra.mxu0 0
    %453 = vmatpush.bf16.msra.mxu0 0
    %454 = vmatpush.bf16.msra.mxu0 %v252
    %455 = vmatpush.bf16.msra.mxu0 %v236
    %456 = vmatmul.bf16.gmra.mxu0 %v290
    %v457 = vpop.f32.mrf.mxu0
    %v458 = vadd.f32 %v108, %v457
    %v459 = vpop.f32.mrf.mxu0
    %460 = vdwg.mxu0
    %461 = vmatpush.bf16.msra.mxu0 0
    %462 = vmatpush.bf16.msra.mxu0 0
    %463 = vmatpush.bf16.msra.mxu0 0
    %464 = vmatpush.bf16.msra.mxu0 0
    %465 = vmatpush.bf16.msra.mxu0 0
    %466 = vmatpush.bf16.msra.mxu0 0
    %467 = vmatpush.bf16.msra.mxu0 %v253
    %468 = vmatpush.bf16.msra.mxu0 %v237
    %469 = vmatmul.bf16.gmra.mxu0 %v290
    %v470 = vpop.f32.mrf.mxu0
    %v471 = vadd.f32 %v109, %v470
    %v472 = vpop.f32.mrf.mxu0
    %473 = vdwg.mxu0
    %474 = vmatpush.bf16.msra.mxu0 0
    %475 = vmatpush.bf16.msra.mxu0 0
    %476 = vmatpush.bf16.msra.mxu0 0
    %477 = vmatpush.bf16.msra.mxu0 0
    %478 = vmatpush.bf16.msra.mxu0 0
    %479 = vmatpush.bf16.msra.mxu0 0
    %480 = vmatpush.bf16.msra.mxu0 %v254
    %481 = vmatpush.bf16.msra.mxu0 %v238
    %482 = vmatmul.bf16.gmra.mxu0 %v290
    %v483 = vpop.f32.mrf.mxu0
    %v484 = vadd.f32 %v110, %v483
    %v485 = vpop.f32.mrf.mxu0
    %486 = vdwg.mxu0
    %487 = vmatpush.bf16.msra.mxu0 0
    %488 = vmatpush.bf16.msra.mxu0 0
    %489 = vmatpush.bf16.msra.mxu0 0
    %490 = vmatpush.bf16.msra.mxu0 0
    %491 = vmatpush.bf16.msra.mxu0 0
    %492 = vmatpush.bf16.msra.mxu0 0
    %493 = vmatpush.bf16.msra.mxu0 %v255
    %494 = vmatpush.bf16.msra.mxu0 %v239
    %495 = vmatmul.bf16.gmra.mxu0 %v290
    %v496 = vpop.f32.mrf.mxu0
    %v497 = vadd.f32 %v111, %v496
    %v498 = vpop.f32.mrf.mxu0
    %499 = vdwg.mxu0
    %v500 = vmax.f32 %v302, 0.0
    %v501 = vmax.f32 %v315, 0.0
    %v502 = vmax.f32 %v328, 0.0
    %v503 = vmax.f32 %v341, 0.0
    %v504 = vmax.f32 %v354, 0.0
    %v505 = vmax.f32 %v367, 0.0
    %v506 = vmax.f32 %v380, 0.0
    %v507 = vmax.f32 %v393, 0.0
    %v508 = vmax.f32 %v406, 0.0
    %v509 = vmax.f32 %v419, 0.0
    %v510 = vmax.f32 %v432, 0.0
    %v511 = vmax.f32 %v445, 0.0
    %v512 = vmax.f32 %v458, 0.0
    %v513 = vmax.f32 %v471, 0.0
    %v514 = vmax.f32 %v484, 0.0
    %v515 = vmax.f32 %v497, 0.0
    %v516 = vpack.c.bf16 %v501, %v500
    %v517 = vpack.c.bf16 %v503, %v502
    %v518 = vpack.c.bf16 %v505, %v504
    %v519 = vpack.c.bf16 %v507, %v506
    %v520 = vpack.c.bf16 %v509, %v508
    %v521 = vpack.c.bf16 %v511, %v510
    %v522 = vpack.c.bf16 %v513, %v512
    %v523 = vpack.c.bf16 %v515, %v514
    %v532 = vrot.slane %v516, 3
    %v533 = vrot.slane %v517, 6
    %v534 = vrot.slane %v517, 1
    %v535 = vrot.slane %v518, 4
    %v536 = vrot.slane %v518, 7
    %v537 = vrot.slane %v519, 2
    %v538 = vrot.slane %v519, 5
    %v539 = vrot.slane %v520, 3
    %v540 = vrot.slane %v521, 6
    %v541 = vrot.slane %v521, 1
    %v542 = vrot.slane %v522, 4
    %v543 = vrot.slane %v522, 7
    %v544 = vrot.slane %v523, 2
    %v545 = vrot.slane %v523, 5
    %vm546 = vcmask 1040384
    %v549 = vsel %vm546, %v516, %v532
    %vm550 = vcmask 1042434
    %v553 = vsel %vm550, %v533, %v534
    %vm554 = vcmask 1041408
    %v555 = vsel %vm554, %v549, %v553
    %vm556 = vcmask 1044484
    %v559 = vsel %vm556, %v535, %v536
    %vm560 = vcmask 1046534
    %v563 = vsel %vm560, %v537, %v538
    %vm564 = vcmask 1045508
    %v565 = vsel %vm564, %v559, %v563
    %vm566 = vcmask 1043456
    %v567 = vsel %vm566, %v555, %v565
    %v570 = vsel %vm546, %v520, %v539
    %v573 = vsel %vm550, %v540, %v541
    %v574 = vsel %vm554, %v570, %v573
    %v577 = vsel %vm556, %v542, %v543
    %v580 = vsel %vm560, %v544, %v545
    %v581 = vsel %vm564, %v577, %v580
    %v582 = vsel %vm566, %v574, %v581
    %585 = vst [vmem:[#allocation8] sm:$0xff] %v567
    %586 = vst [vmem:[#allocation8 + $0x8] sm:$0xff] %v582
    // Predicated region
    $region26: #{tpu_custom_call.1} parent=1 // pred_check
      _
    $region27: #{tpu_custom_call.1} parent=1 // pred_check_branch
      %588 = sbr.rel (0) target = $region29
    $region28: #{tpu_custom_call.1} parent=1 // pred_region
      %590 = vsyncadd [#allocation4], 0
      %s592 = sshll.u32 [#allocation8], 4
      %s593 = int_to_ptr.vmem [resolvable:$true] %s592
      %s594 = sshll.u32 %s3, 4
      %s595 = int_to_ptr.hbm [resolvable:$true] %s594
      %597 = dma.vmem_to_hbm [thread:$0]  %s593, 256, %s595, [#allocation4]
    $region29: #{tpu_custom_call.1} parent=1 // pred_fallthru
      _
    // Predicated region
    $region30: #{tpu_custom_call.1} parent=1 // pred_check
      _
    $region31: #{tpu_custom_call.1} parent=1 // pred_check_branch
      %599 = sbr.rel (0) target = $region33
    $region32: #{tpu_custom_call.1} parent=1 // pred_region
      %601 = dma.done [#allocation4], 256
    $region33: #{tpu_custom_call.1} parent=1 // pred_fallthru
      _
    %602 = vsyncpa [#allocation3], 1
    %603 = vsyncpa [#allocation6], 1
    %604 = vsyncpa [#allocation4], 1

</llo_original>
